<compile_context>
chip_gen: v7x
topology: tpu7x:2x2x1
jax: 0.10.0
libtpu: 0.0.40
codegen_flags: <defaults>
</compile_context>

<pallas_src>
import math
import jax
import jax.numpy as jnp
from jax import lax
from jax.experimental import pallas as pl
from jax.experimental.pallas import tpu as pltpu

# ----------------------------- model sizes ---------------------------------
B = 2              # batch
S = 8              # seq_length
D = 32             # d_model
H = 4              # number of heads
DK = D // H        # per-head dim
R = H * B * S      # 64 head-expanded attention rows (head-major)
SCALE = 1.0 / math.sqrt(DK)
MASK_VALUE = -1e9


def mha_kernel(xbd_ref, wqkv_ref, bqkv_ref, amask_ref, rep_ref, hmask_ref,
               fold_ref, wo_ref, bo_ref, o_ref):
    """Whole forward in one invocation; every operand is VMEM resident.

    xbd_ref   : (R, H*D)    bf16  block-diagonal head-expanded input
    wqkv_ref  : (H*D, 3*DK) bf16  per-head-stacked fused [Wq | Wk | Wv]
    bqkv_ref  : (R, 3*DK)   f32   per-row fused bias (head slices of bq/bk/bv)
    amask_ref : (R, R)      f32   additive block-diag (batch, head) mask
    rep_ref   : (DK, D)     bf16  lane-replication matrix (I_DK tiled H times)
    hmask_ref : (R, D)      f32   0/1 head-block column mask
    fold_ref  : (B*S, R)    bf16  row-fold matrix (sums the H row blocks)
    wo_ref    : (D, D)      bf16  output projection
    bo_ref    : (1, D)      f32   output bias
    o_ref     : (B*S, D)    f32   output slab
    """
    # 1) fused, head-expanded QKV projection: ONE MXU dispatch for all
    #    batches and heads, f32 accumulation, single bias add.
    qkv = jnp.dot(xbd_ref[...], wqkv_ref[...],
                  preferred_element_type=jnp.float32) + bqkv_ref[...]   # (R, 3*DK)
    qkv = qkv.astype(jnp.bfloat16)
    q_e = qkv[:, 0:DK]            # (R, DK)
    k_e = qkv[:, DK:2 * DK]       # (R, DK)
    v_e = qkv[:, 2 * DK:3 * DK]   # (R, DK)

    # 2) ONE QK^T for all (batch, head) pairs; additive block-diagonal mask
    #    confines attention to each (batch, head) block.
    s = lax.dot_general(q_e, k_e, (((1,), (1,)), ((), ())),
                        preferred_element_type=jnp.float32)             # (R, R)
    s = s * SCALE + amask_ref[...]

    # 3) softmax over the full lane-dense row (masked lanes contribute 0).
    m = jnp.max(s, axis=-1, keepdims=True)
    p = jnp.exp(s - m)
    denom = jnp.sum(p, axis=-1, keepdims=True)
    attn = p / denom              # exact division (parity with torch.softmax)

    # 4) ONE P@V for all (batch, head) pairs.
    ctx_e = jnp.dot(attn.astype(jnp.bfloat16), v_e,
                    preferred_element_type=jnp.float32)                 # (R, DK)

    # 5) fold the head-expanded context back to a (B*S, D) slab with two
    #    constant matmuls: replicate across head column blocks, zero the
    #    wrong blocks, sum the H row blocks.
    ctx_rep = jnp.dot(ctx_e.astype(jnp.bfloat16), rep_ref[...],
                      preferred_element_type=jnp.float32)               # (R, D)
    ctx_bd = ctx_rep * hmask_ref[...]
    ctx = jnp.dot(fold_ref[...], ctx_bd.astype(jnp.bfloat16),
                  preferred_element_type=jnp.float32)                   # (B*S, D)

    # 6) single output projection + single bias add, one full-ref store.
    out = jnp.dot(ctx.astype(jnp.bfloat16), wo_ref[...],
                  preferred_element_type=jnp.float32) + bo_ref[...]
    o_ref[...] = out.astype(o_ref.dtype)


@jax.jit
def multi_headed_attention(x, wq, bq, wk, bk, wv, bv, wo, bo):
    """x: [B, S, D] float32 -> [B, S, D] float32."""
    x2d = x.reshape(B * S, D)

    # ---- head-expanded operands (wrapper-side XLA prep, outside the kernel) --
    # Block-diagonal input: row h*(B*S)+i holds x2d[i] in column block h.
    x_bd = jnp.kron(jnp.eye(H, dtype=x2d.dtype), x2d).astype(jnp.bfloat16)   # (R, H*D)

    def stack_heads(w):  # (D, D) -> (H*D, DK): head-h column slice in row block h
        return w.reshape(D, H, DK).transpose(1, 0, 2).reshape(H * D, DK)

    wqkv_stack = jnp.concatenate(
        [stack_heads(wq), stack_heads(wk), stack_heads(wv)],
        axis=1).astype(jnp.bfloat16)                                         # (H*D, 3*DK)

    b_heads = jnp.concatenate(
        [bq.reshape(H, DK), bk.reshape(H, DK), bv.reshape(H, DK)], axis=1)   # (H, 3*DK)
    bqkv_stack = jnp.repeat(b_heads, B * S, axis=0).astype(jnp.float32)      # (R, 3*DK)

    rows = jnp.arange(R)
    head_id = rows // (B * S)
    batch_id = (rows // S) % B
    same_block = (head_id[:, None] == head_id[None, :]) & \
                 (batch_id[:, None] == batch_id[None, :])
    attn_mask = jnp.where(same_block, 0.0, MASK_VALUE).astype(jnp.float32)   # (R, R)

    rep = jnp.tile(jnp.eye(DK, dtype=jnp.bfloat16), (1, H))                  # (DK, D)
    cols = jnp.arange(D)
    hmask = (head_id[:, None] == cols[None, :] // DK).astype(jnp.float32)    # (R, D)
    fold = jnp.tile(jnp.eye(B * S, dtype=jnp.bfloat16), (1, H))              # (B*S, R)

    # No grid: everything is a single VMEM-resident block.
    vmem = pl.BlockSpec(memory_space=pltpu.MemorySpace.VMEM)
    out2d = pl.pallas_call(
        mha_kernel,
        out_shape=jax.ShapeDtypeStruct((B * S, D), jnp.float32),
        in_specs=[vmem] * 9,
        out_specs=vmem,
    )(x_bd, wqkv_stack, bqkv_stack, attn_mask, rep, hmask, fold,
      wo.astype(jnp.bfloat16), bo.astype(jnp.float32))

    return out2d.reshape(B, S, D)


def reference_mha(x, wq, bq, wk, bk, wv, bv, wo, bo):
    """Pure-JAX f32 reference for a sanity check."""
    q = x @ wq + bq
    k = x @ wk + bk
    v = x @ wv + bv

    def split(t):
        return t.reshape(B, S, H, DK).transpose(0, 2, 1, 3)

    q, k, v = split(q), split(k), split(v)
    scores = jnp.einsum('bhqd,bhkd->bhqk', q, k) / math.sqrt(DK)
    attn = jax.nn.softmax(scores, axis=-1)
    ctx = jnp.einsum('bhqk,bhkd->bhqd', attn, v)
    ctx = ctx.transpose(0, 2, 1, 3).reshape(B, S, D)
    return ctx @ wo + bo


if __name__ == "__main__":
    key = jax.random.PRNGKey(0)
    kx, kq, kk, kv, ko, kbq, kbk, kbv, kbo = jax.random.split(key, 9)

    # Deterministic synthetic parameters (nn.Linear-like fan-in scaling).
    scale = 1.0 / math.sqrt(D)
    x  = jax.random.normal(kx, (B, S, D), dtype=jnp.float32)
    wq = jax.random.uniform(kq, (D, D), jnp.float32, -scale, scale)
    wk = jax.random.uniform(kk, (D, D), jnp.float32, -scale, scale)
    wv = jax.random.uniform(kv, (D, D), jnp.float32, -scale, scale)
    wo = jax.random.uniform(ko, (D, D), jnp.float32, -scale, scale)
    bq = jax.random.uniform(kbq, (1, D), jnp.float32, -scale, scale)
    bk = jax.random.uniform(kbk, (1, D), jnp.float32, -scale, scale)
    bv = jax.random.uniform(kbv, (1, D), jnp.float32, -scale, scale)
    bo = jax.random.uniform(kbo, (1, D), jnp.float32, -scale, scale)

    out = multi_headed_attention(x, wq, bq, wk, bk, wv, bv, wo, bo)
    out = jax.block_until_ready(out)

    ref = reference_mha(x, wq, bq, wk, bk, wv, bv, wo, bo)
    assert out.shape == (B, S, D)
    # bf16 MXU operands (f32 accumulation) -> ~1e-2 level tolerance vs f32 ref
    err = float(jnp.max(jnp.abs(out - ref)))
    assert jnp.allclose(out, ref, atol=2e-2, rtol=2e-2), err

    print("KERNEL_OK")
</pallas_src>

<mosaic_0001>
module attributes {stable_mosaic.version = 11 : i64} {
  func.func @mha_kernel(%arg0: memref<64x128xbf16, #tpu.memory_space<vmem>>, %arg1: memref<128x24xbf16, #tpu.memory_space<vmem>>, %arg2: memref<64x24xf32, #tpu.memory_space<vmem>>, %arg3: memref<64x64xf32, #tpu.memory_space<vmem>>, %arg4: memref<8x32xbf16, #tpu.memory_space<vmem>>, %arg5: memref<64x32xf32, #tpu.memory_space<vmem>>, %arg6: memref<16x64xbf16, #tpu.memory_space<vmem>>, %arg7: memref<32x32xbf16, #tpu.memory_space<vmem>>, %arg8: memref<1x32xf32, #tpu.memory_space<vmem>>, %arg9: memref<16x32xf32, #tpu.memory_space<vmem>>) attributes {dimension_semantics = [], scalar_prefetch = 0 : i64, scratch_operands = 0 : i64, tpu.core_type = #tpu.core_type<tc>} {
    %c0 = arith.constant 0 : index
    %c0_0 = arith.constant 0 : index
    %0 = vector.load %arg0[%c0, %c0_0] : memref<64x128xbf16, #tpu.memory_space<vmem>>, vector<64x128xbf16>
    %c0_1 = arith.constant 0 : index
    %c0_2 = arith.constant 0 : index
    %1 = vector.load %arg1[%c0_1, %c0_2] : memref<128x24xbf16, #tpu.memory_space<vmem>>, vector<128x24xbf16>
    %cst = arith.constant dense<0.000000e+00> : vector<64x24xf32>
    %2 = tpu.matmul %0, %1, %cst {dimension_numbers = #tpu.dot_dimension_numbers<[1], [0], [0], [1], [0, 0, 1, 1], [], []>} : vector<64x128xbf16>, vector<128x24xbf16>, vector<64x24xf32> -> vector<64x24xf32>
    %c0_3 = arith.constant 0 : index
    %c0_4 = arith.constant 0 : index
    %3 = vector.load %arg2[%c0_3, %c0_4] : memref<64x24xf32, #tpu.memory_space<vmem>>, vector<64x24xf32>
    %4 = arith.addf %2, %3 : vector<64x24xf32>
    %5 = arith.truncf %4 : vector<64x24xf32> to vector<64x24xbf16>
    %6 = vector.extract_strided_slice %5 {offsets = [0, 0], sizes = [64, 8], strides = [1, 1]} : vector<64x24xbf16> to vector<64x8xbf16>
    %7 = vector.extract_strided_slice %5 {offsets = [0, 8], sizes = [64, 8], strides = [1, 1]} : vector<64x24xbf16> to vector<64x8xbf16>
    %8 = vector.extract_strided_slice %5 {offsets = [0, 16], sizes = [64, 8], strides = [1, 1]} : vector<64x24xbf16> to vector<64x8xbf16>
    %cst_5 = arith.constant dense<0.000000e+00> : vector<64x64xf32>
    %9 = tpu.matmul %6, %7, %cst_5 {dimension_numbers = #tpu.dot_dimension_numbers<[1], [1], [0], [0], [0, 0, 1, 0], [], []>} : vector<64x8xbf16>, vector<64x8xbf16>, vector<64x64xf32> -> vector<64x64xf32>
    %cst_6 = arith.constant 0.353553385 : f32
    %10 = vector.broadcast %cst_6 : f32 to vector<64x64xf32>
    %11 = arith.mulf %9, %10 : vector<64x64xf32>
    %c0_7 = arith.constant 0 : index
    %c0_8 = arith.constant 0 : index
    %12 = vector.load %arg3[%c0_7, %c0_8] : memref<64x64xf32, #tpu.memory_space<vmem>>, vector<64x64xf32>
    %13 = arith.addf %11, %12 : vector<64x64xf32>
    %cst_9 = arith.constant dense<0xFF800000> : vector<64xf32>
    %14 = vector.multi_reduction <maximumf>, %13, %cst_9 [1] : vector<64x64xf32> to vector<64xf32>
    %15 = vector.shape_cast %14 : vector<64xf32> to vector<64x1xf32>
    %16 = vector.broadcast %15 : vector<64x1xf32> to vector<64x64xf32>
    %17 = arith.subf %13, %16 : vector<64x64xf32>
    %18 = math.exp %17 : vector<64x64xf32>
    %cst_10 = arith.constant dense<0.000000e+00> : vector<64xf32>
    %19 = vector.multi_reduction <add>, %18, %cst_10 [1] : vector<64x64xf32> to vector<64xf32>
    %20 = vector.shape_cast %19 : vector<64xf32> to vector<64x1xf32>
    %21 = vector.broadcast %20 : vector<64x1xf32> to vector<64x64xf32>
    %22 = arith.divf %18, %21 : vector<64x64xf32>
    %23 = arith.truncf %22 : vector<64x64xf32> to vector<64x64xbf16>
    %cst_11 = arith.constant dense<0.000000e+00> : vector<64x8xf32>
    %24 = tpu.matmul %23, %8, %cst_11 {dimension_numbers = #tpu.dot_dimension_numbers<[1], [0], [0], [1], [0, 0, 1, 1], [], []>} : vector<64x64xbf16>, vector<64x8xbf16>, vector<64x8xf32> -> vector<64x8xf32>
    %25 = arith.truncf %24 : vector<64x8xf32> to vector<64x8xbf16>
    %c0_12 = arith.constant 0 : index
    %c0_13 = arith.constant 0 : index
    %26 = vector.load %arg4[%c0_12, %c0_13] : memref<8x32xbf16, #tpu.memory_space<vmem>>, vector<8x32xbf16>
    %cst_14 = arith.constant dense<0.000000e+00> : vector<64x32xf32>
    %27 = tpu.matmul %25, %26, %cst_14 {dimension_numbers = #tpu.dot_dimension_numbers<[1], [0], [0], [1], [0, 0, 1, 1], [], []>} : vector<64x8xbf16>, vector<8x32xbf16>, vector<64x32xf32> -> vector<64x32xf32>
    %c0_15 = arith.constant 0 : index
    %c0_16 = arith.constant 0 : index
    %28 = vector.load %arg5[%c0_15, %c0_16] : memref<64x32xf32, #tpu.memory_space<vmem>>, vector<64x32xf32>
    %29 = arith.mulf %27, %28 : vector<64x32xf32>
    %c0_17 = arith.constant 0 : index
    %c0_18 = arith.constant 0 : index
    %30 = vector.load %arg6[%c0_17, %c0_18] : memref<16x64xbf16, #tpu.memory_space<vmem>>, vector<16x64xbf16>
    %31 = arith.truncf %29 : vector<64x32xf32> to vector<64x32xbf16>
    %cst_19 = arith.constant dense<0.000000e+00> : vector<16x32xf32>
    %32 = tpu.matmul %30, %31, %cst_19 {dimension_numbers = #tpu.dot_dimension_numbers<[1], [0], [0], [1], [0, 0, 1, 1], [], []>} : vector<16x64xbf16>, vector<64x32xbf16>, vector<16x32xf32> -> vector<16x32xf32>
    %33 = arith.truncf %32 : vector<16x32xf32> to vector<16x32xbf16>
    %c0_20 = arith.constant 0 : index
    %c0_21 = arith.constant 0 : index
    %34 = vector.load %arg7[%c0_20, %c0_21] : memref<32x32xbf16, #tpu.memory_space<vmem>>, vector<32x32xbf16>
    %cst_22 = arith.constant dense<0.000000e+00> : vector<16x32xf32>
    %35 = tpu.matmul %33, %34, %cst_22 {dimension_numbers = #tpu.dot_dimension_numbers<[1], [0], [0], [1], [0, 0, 1, 1], [], []>} : vector<16x32xbf16>, vector<32x32xbf16>, vector<16x32xf32> -> vector<16x32xf32>
    %c0_23 = arith.constant 0 : index
    %c0_24 = arith.constant 0 : index
    %36 = vector.load %arg8[%c0_23, %c0_24] : memref<1x32xf32, #tpu.memory_space<vmem>>, vector<1x32xf32>
    %37 = vector.broadcast %36 : vector<1x32xf32> to vector<16x32xf32>
    %38 = arith.addf %35, %37 : vector<16x32xf32>
    %c0_25 = arith.constant 0 : index
    %c0_26 = arith.constant 0 : index
    %39 = vector.load %arg9[%c0_25, %c0_26] : memref<16x32xf32, #tpu.memory_space<vmem>>, vector<16x32xf32>
    tpu.vector_store %arg9[%c0_25, %c0_26], %38 {strides = array<i32>} : memref<16x32xf32, #tpu.memory_space<vmem>>, vector<16x32xf32>,
    return
  }
}

</mosaic_0001>

<llo_original>
// kernel: tile.14
$region0: #{tile.14}
  %s0 = inlined_call_operand.vmem [shape: bf16[8,4,8], index: 0, kind: input, shape index: {}]
  %s1 = inlined_call_operand.vmem [shape: bf16[8,32], index: 1, kind: output, shape index: {}]
  $region1: #{tile.14} parent=0
    #allocation0 [shape = 'u8[4096]{0}', space=vmem, size = 0x1000, scoped, tag = 'scoped mem for output reshape']
    #allocation1 [shape = 'u8[32768]{0}', space=vmem, size = 0x8000, scoped, tag = 'scoped mem for input reshape']
    %s3 = smul.u32 2, 2
    %s4 = sshllo.u32 0, %s3
    %s5 = smul.addr 2, 7
    %s6 = scalar_lea.vmem %s0, %s5
    %s7 = sshrl.u32 %s4, 1
    %s8 = sor.u32 %s4, %s7
    %s9 = sand.u32 %s8, 85
    %s10 = sshrl.u32 %s9, 1
    %s11 = sor.u32 %s9, %s10
    %s12 = sand.u32 51, %s11
    %s13 = sshrl.u32 %s12, 2
    %s14 = sor.u32 %s12, %s13
    %s15 = sand.u32 15, %s14
    %v16 = vld [vmem:[%s6] sm:%s15]
    %v17 = vunpack.c.l.bf16 %v16
    %v18 = vunpack.c.h.bf16 %v16
    %s19 = scalar_lea.vmem [#allocation1], 56
    %20 = vst [vmem:[%s19] sm:%s4] %v17
    %s21 = smul.addr 2, 6
    %s22 = scalar_lea.vmem %s0, %s21
    %s23 = sshrl.u32 %s4, 1
    %s24 = sor.u32 %s4, %s23
    %s25 = sand.u32 %s24, 85
    %s26 = sshrl.u32 %s25, 1
    %s27 = sor.u32 %s25, %s26
    %s28 = sand.u32 51, %s27
    %s29 = sshrl.u32 %s28, 2
    %s30 = sor.u32 %s28, %s29
    %s31 = sand.u32 15, %s30
    %v32 = vld [vmem:[%s22] sm:%s31]
    %v33 = vunpack.c.l.bf16 %v32
    %v34 = vunpack.c.h.bf16 %v32
    %s35 = scalar_lea.vmem [#allocation1], 48
    %36 = vst [vmem:[%s35] sm:%s4] %v33
    %s37 = smul.addr 2, 5
    %s38 = scalar_lea.vmem %s0, %s37
    %s39 = sshrl.u32 %s4, 1
    %s40 = sor.u32 %s4, %s39
    %s41 = sand.u32 %s40, 85
    %s42 = sshrl.u32 %s41, 1
    %s43 = sor.u32 %s41, %s42
    %s44 = sand.u32 51, %s43
    %s45 = sshrl.u32 %s44, 2
    %s46 = sor.u32 %s44, %s45
    %s47 = sand.u32 15, %s46
    %v48 = vld [vmem:[%s38] sm:%s47]
    %v49 = vunpack.c.l.bf16 %v48
    %v50 = vunpack.c.h.bf16 %v48
    %s51 = scalar_lea.vmem [#allocation1], 40
    %52 = vst [vmem:[%s51] sm:%s4] %v49
    %s53 = smul.addr 2, 4
    %s54 = scalar_lea.vmem %s0, %s53
    %s55 = sshrl.u32 %s4, 1
    %s56 = sor.u32 %s4, %s55
    %s57 = sand.u32 %s56, 85
    %s58 = sshrl.u32 %s57, 1
    %s59 = sor.u32 %s57, %s58
    %s60 = sand.u32 51, %s59
    %s61 = sshrl.u32 %s60, 2
    %s62 = sor.u32 %s60, %s61
    %s63 = sand.u32 15, %s62
    %v64 = vld [vmem:[%s54] sm:%s63]
    %v65 = vunpack.c.l.bf16 %v64
    %v66 = vunpack.c.h.bf16 %v64
    %s67 = scalar_lea.vmem [#allocation1], 32
    %68 = vst [vmem:[%s67] sm:%s4] %v65
    %s69 = smul.addr 2, 3
    %s70 = scalar_lea.vmem %s0, %s69
    %s71 = sshrl.u32 %s4, 1
    %s72 = sor.u32 %s4, %s71
    %s73 = sand.u32 %s72, 85
    %s74 = sshrl.u32 %s73, 1
    %s75 = sor.u32 %s73, %s74
    %s76 = sand.u32 51, %s75
    %s77 = sshrl.u32 %s76, 2
    %s78 = sor.u32 %s76, %s77
    %s79 = sand.u32 15, %s78
    %v80 = vld [vmem:[%s70] sm:%s79]
    %v81 = vunpack.c.l.bf16 %v80
    %v82 = vunpack.c.h.bf16 %v80
    %s83 = scalar_lea.vmem [#allocation1], 24
    %84 = vst [vmem:[%s83] sm:%s4] %v81
    %s85 = smul.addr 2, 2
    %s86 = scalar_lea.vmem %s0, %s85
    %s87 = sshrl.u32 %s4, 1
    %s88 = sor.u32 %s4, %s87
    %s89 = sand.u32 %s88, 85
    %s90 = sshrl.u32 %s89, 1
    %s91 = sor.u32 %s89, %s90
    %s92 = sand.u32 51, %s91
    %s93 = sshrl.u32 %s92, 2
    %s94 = sor.u32 %s92, %s93
    %s95 = sand.u32 15, %s94
    %v96 = vld [vmem:[%s86] sm:%s95]
    %v97 = vunpack.c.l.bf16 %v96
    %v98 = vunpack.c.h.bf16 %v96
    %s99 = scalar_lea.vmem [#allocation1], 16
    %100 = vst [vmem:[%s99] sm:%s4] %v97
    %s101 = scalar_lea.vmem %s0, 2
    %s102 = sshrl.u32 %s4, 1
    %s103 = sor.u32 %s4, %s102
    %s104 = sand.u32 %s103, 85
    %s105 = sshrl.u32 %s104, 1
    %s106 = sor.u32 %s104, %s105
    %s107 = sand.u32 51, %s106
    %s108 = sshrl.u32 %s107, 2
    %s109 = sor.u32 %s107, %s108
    %s110 = sand.u32 15, %s109
    %v111 = vld [vmem:[%s101] sm:%s110]
    %v112 = vunpack.c.l.bf16 %v111
    %v113 = vunpack.c.h.bf16 %v111
    %s114 = scalar_lea.vmem [#allocation1], 8
    %115 = vst [vmem:[%s114] sm:%s4] %v112
    %s116 = sshrl.u32 %s4, 1
    %s117 = sor.u32 %s4, %s116
    %s118 = sand.u32 %s117, 85
    %s119 = sshrl.u32 %s118, 1
    %s120 = sor.u32 %s118, %s119
    %s121 = sand.u32 51, %s120
    %s122 = sshrl.u32 %s121, 2
    %s123 = sor.u32 %s121, %s122
    %s124 = sand.u32 15, %s123
    %v125 = vld [vmem:[%s0] sm:%s124]
    %v126 = vunpack.c.l.bf16 %v125
    %v127 = vunpack.c.h.bf16 %v125
    %128 = vst [vmem:[#allocation1] sm:%s4] %v126
    %v129 = vld [vmem:[#allocation1] ss:$8 sm:$0xf]
    %v130 = vld [vmem:[#allocation1] ss:$8 sm:$0xf0]
    %vm131 = vcmask 1047556
    %v132 = vsel %vm131, %v130, %v129
    %vm133 = vcmask 64512
    %134 = vst.msk [vmem:[#allocation0] sm:$0xff] %vm133, %v132
    %s135 = scalar_lea.vmem [#allocation1], 3
    %v136 = vld [vmem:[%s135] ss:$8 sm:$0xf]
    %s137 = scalar_lea.vmem [#allocation1], 3
    %v138 = vld [vmem:[%s137] ss:$8 sm:$0xf0]
    %vm139 = vcmask 1047556
    %v140 = vsel %vm139, %v138, %v136
    %141 = vrot.lane.b32.xlu0 %v140, 24
    %v142 = vpop.permute.xlu0 %141
    %vm143 = vcmask 261312
    %144 = vst.msk [vmem:[#allocation0] sm:$0xff] %vm143, %v142
    %s145 = scalar_lea.vmem [#allocation1], 2
    %v146 = vld [vmem:[%s145] ss:$8 sm:$0xf]
    %s147 = scalar_lea.vmem [#allocation1], 2
    %v148 = vld [vmem:[%s147] ss:$8 sm:$0xf0]
    %vm149 = vcmask 1047556
    %v150 = vsel %vm149, %v148, %v146
    %151 = vrot.lane.b32.xlu0 %v150, 16
    %v152 = vpop.permute.xlu0 %151
    %vm153 = vcmask 195712
    %154 = vst.msk [vmem:[#allocation0] sm:$0xff] %vm153, %v152
    %s155 = scalar_lea.vmem [#allocation1], 1
    %v156 = vld [vmem:[%s155] ss:$8 sm:$0xf]
    %s157 = scalar_lea.vmem [#allocation1], 1
    %v158 = vld [vmem:[%s157] ss:$8 sm:$0xf0]
    %vm159 = vcmask 1047556
    %v160 = vsel %vm159, %v158, %v156
    %161 = vrot.lane.b32.xlu0 %v160, 8
    %v162 = vpop.permute.xlu0 %161
    %vm163 = vcmask 130112
    %164 = vst.msk [vmem:[#allocation0] sm:$0xff] %vm163, %v162
    %s166 = smul.u32 4, 2
    %s167 = sshllo.u32 0, %s166
    %s168 = sshrl.u32 %s166, 1
    %v169 = vld [vmem:[#allocation0] sm:%s167]
    %v170 = vpack.c.bf16 0.0, %v169
    %s171 = sshllo.u32 0, %s168
    %172 = vst [vmem:[%s1] sm:%s171] %v170

// kernel: tile.19
$region0: #{tile.19}
  %s0 = inlined_call_operand.vmem [shape: bf16[16,4,16], index: 0, kind: input, shape index: {}]
  %s1 = inlined_call_operand.vmem [shape: bf16[16,64], index: 1, kind: output, shape index: {}]
  $region1: #{tile.19} parent=0
    #allocation0 [shape = 'u8[8192]{0}', space=vmem, size = 0x2000, scoped, tag = 'scoped mem for output reshape']
    #allocation1 [shape = 'u8[65536]{0}', space=vmem, size = 0x10000, scoped, tag = 'scoped mem for input reshape']
    %s3 = smul.u32 2, 2
    %s4 = sshllo.u32 0, %s3
    %s5 = smul.addr 2, 15
    %s6 = scalar_lea.vmem %s0, %s5
    %s7 = sshrl.u32 %s4, 1
    %s8 = sor.u32 %s4, %s7
    %s9 = sand.u32 %s8, 85
    %s10 = sshrl.u32 %s9, 1
    %s11 = sor.u32 %s9, %s10
    %s12 = sand.u32 51, %s11
    %s13 = sshrl.u32 %s12, 2
    %s14 = sor.u32 %s12, %s13
    %s15 = sand.u32 15, %s14
    %v16 = vld [vmem:[%s6] sm:%s15]
    %v17 = vunpack.c.l.bf16 %v16
    %v18 = vunpack.c.h.bf16 %v16
    %s19 = scalar_lea.vmem [#allocation1], 120
    %20 = vst [vmem:[%s19] sm:%s4] %v17
    %s21 = smul.addr 2, 14
    %s22 = scalar_lea.vmem %s0, %s21
    %s23 = sshrl.u32 %s4, 1
    %s24 = sor.u32 %s4, %s23
    %s25 = sand.u32 %s24, 85
    %s26 = sshrl.u32 %s25, 1
    %s27 = sor.u32 %s25, %s26
    %s28 = sand.u32 51, %s27
    %s29 = sshrl.u32 %s28, 2
    %s30 = sor.u32 %s28, %s29
    %s31 = sand.u32 15, %s30
    %v32 = vld [vmem:[%s22] sm:%s31]
    %v33 = vunpack.c.l.bf16 %v32
    %v34 = vunpack.c.h.bf16 %v32
    %s35 = scalar_lea.vmem [#allocation1], 112
    %36 = vst [vmem:[%s35] sm:%s4] %v33
    %s37 = smul.addr 2, 13
    %s38 = scalar_lea.vmem %s0, %s37
    %s39 = sshrl.u32 %s4, 1
    %s40 = sor.u32 %s4, %s39
    %s41 = sand.u32 %s40, 85
    %s42 = sshrl.u32 %s41, 1
    %s43 = sor.u32 %s41, %s42
    %s44 = sand.u32 51, %s43
    %s45 = sshrl.u32 %s44, 2
    %s46 = sor.u32 %s44, %s45
    %s47 = sand.u32 15, %s46
    %v48 = vld [vmem:[%s38] sm:%s47]
    %v49 = vunpack.c.l.bf16 %v48
    %v50 = vunpack.c.h.bf16 %v48
    %s51 = scalar_lea.vmem [#allocation1], 104
    %52 = vst [vmem:[%s51] sm:%s4] %v49
    %s53 = smul.addr 2, 12
    %s54 = scalar_lea.vmem %s0, %s53
    %s55 = sshrl.u32 %s4, 1
    %s56 = sor.u32 %s4, %s55
    %s57 = sand.u32 %s56, 85
    %s58 = sshrl.u32 %s57, 1
    %s59 = sor.u32 %s57, %s58
    %s60 = sand.u32 51, %s59
    %s61 = sshrl.u32 %s60, 2
    %s62 = sor.u32 %s60, %s61
    %s63 = sand.u32 15, %s62
    %v64 = vld [vmem:[%s54] sm:%s63]
    %v65 = vunpack.c.l.bf16 %v64
    %v66 = vunpack.c.h.bf16 %v64
    %s67 = scalar_lea.vmem [#allocation1], 96
    %68 = vst [vmem:[%s67] sm:%s4] %v65
    %s69 = smul.addr 2, 11
    %s70 = scalar_lea.vmem %s0, %s69
    %s71 = sshrl.u32 %s4, 1
    %s72 = sor.u32 %s4, %s71
    %s73 = sand.u32 %s72, 85
    %s74 = sshrl.u32 %s73, 1
    %s75 = sor.u32 %s73, %s74
    %s76 = sand.u32 51, %s75
    %s77 = sshrl.u32 %s76, 2
    %s78 = sor.u32 %s76, %s77
    %s79 = sand.u32 15, %s78
    %v80 = vld [vmem:[%s70] sm:%s79]
    %v81 = vunpack.c.l.bf16 %v80
    %v82 = vunpack.c.h.bf16 %v80
    %s83 = scalar_lea.vmem [#allocation1], 88
    %84 = vst [vmem:[%s83] sm:%s4] %v81
    %s85 = smul.addr 2, 10
    %s86 = scalar_lea.vmem %s0, %s85
    %s87 = sshrl.u32 %s4, 1
    %s88 = sor.u32 %s4, %s87
    %s89 = sand.u32 %s88, 85
    %s90 = sshrl.u32 %s89, 1
    %s91 = sor.u32 %s89, %s90
    %s92 = sand.u32 51, %s91
    %s93 = sshrl.u32 %s92, 2
    %s94 = sor.u32 %s92, %s93
    %s95 = sand.u32 15, %s94
    %v96 = vld [vmem:[%s86] sm:%s95]
    %v97 = vunpack.c.l.bf16 %v96
    %v98 = vunpack.c.h.bf16 %v96
    %s99 = scalar_lea.vmem [#allocation1], 80
    %100 = vst [vmem:[%s99] sm:%s4] %v97
    %s101 = smul.addr 2, 9
    %s102 = scalar_lea.vmem %s0, %s101
    %s103 = sshrl.u32 %s4, 1
    %s104 = sor.u32 %s4, %s103
    %s105 = sand.u32 %s104, 85
    %s106 = sshrl.u32 %s105, 1
    %s107 = sor.u32 %s105, %s106
    %s108 = sand.u32 51, %s107
    %s109 = sshrl.u32 %s108, 2
    %s110 = sor.u32 %s108, %s109
    %s111 = sand.u32 15, %s110
    %v112 = vld [vmem:[%s102] sm:%s111]
    %v113 = vunpack.c.l.bf16 %v112
    %v114 = vunpack.c.h.bf16 %v112
    %s115 = scalar_lea.vmem [#allocation1], 72
    %116 = vst [vmem:[%s115] sm:%s4] %v113
    %s117 = smul.addr 2, 8
    %s118 = scalar_lea.vmem %s0, %s117
    %s119 = sshrl.u32 %s4, 1
    %s120 = sor.u32 %s4, %s119
    %s121 = sand.u32 %s120, 85
    %s122 = sshrl.u32 %s121, 1
    %s123 = sor.u32 %s121, %s122
    %s124 = sand.u32 51, %s123
    %s125 = sshrl.u32 %s124, 2
    %s126 = sor.u32 %s124, %s125
    %s127 = sand.u32 15, %s126
    %v128 = vld [vmem:[%s118] sm:%s127]
    %v129 = vunpack.c.l.bf16 %v128
    %v130 = vunpack.c.h.bf16 %v128
    %s131 = scalar_lea.vmem [#allocation1], 64
    %132 = vst [vmem:[%s131] sm:%s4] %v129
    %s133 = smul.addr 2, 7
    %s134 = scalar_lea.vmem %s0, %s133
    %s135 = sshrl.u32 %s4, 1
    %s136 = sor.u32 %s4, %s135
    %s137 = sand.u32 %s136, 85
    %s138 = sshrl.u32 %s137, 1
    %s139 = sor.u32 %s137, %s138
    %s140 = sand.u32 51, %s139
    %s141 = sshrl.u32 %s140, 2
    %s142 = sor.u32 %s140, %s141
    %s143 = sand.u32 15, %s142
    %v144 = vld [vmem:[%s134] sm:%s143]
    %v145 = vunpack.c.l.bf16 %v144
    %v146 = vunpack.c.h.bf16 %v144
    %s147 = scalar_lea.vmem [#allocation1], 56
    %148 = vst [vmem:[%s147] sm:%s4] %v145
    %s149 = smul.addr 2, 6
    %s150 = scalar_lea.vmem %s0, %s149
    %s151 = sshrl.u32 %s4, 1
    %s152 = sor.u32 %s4, %s151
    %s153 = sand.u32 %s152, 85
    %s154 = sshrl.u32 %s153, 1
    %s155 = sor.u32 %s153, %s154
    %s156 = sand.u32 51, %s155
    %s157 = sshrl.u32 %s156, 2
    %s158 = sor.u32 %s156, %s157
    %s159 = sand.u32 15, %s158
    %v160 = vld [vmem:[%s150] sm:%s159]
    %v161 = vunpack.c.l.bf16 %v160
    %v162 = vunpack.c.h.bf16 %v160
    %s163 = scalar_lea.vmem [#allocation1], 48
    %164 = vst [vmem:[%s163] sm:%s4] %v161
    %s165 = smul.addr 2, 5
    %s166 = scalar_lea.vmem %s0, %s165
    %s167 = sshrl.u32 %s4, 1
    %s168 = sor.u32 %s4, %s167
    %s169 = sand.u32 %s168, 85
    %s170 = sshrl.u32 %s169, 1
    %s171 = sor.u32 %s169, %s170
    %s172 = sand.u32 51, %s171
    %s173 = sshrl.u32 %s172, 2
    %s174 = sor.u32 %s172, %s173
    %s175 = sand.u32 15, %s174
    %v176 = vld [vmem:[%s166] sm:%s175]
    %v177 = vunpack.c.l.bf16 %v176
    %v178 = vunpack.c.h.bf16 %v176
    %s179 = scalar_lea.vmem [#allocation1], 40
    %180 = vst [vmem:[%s179] sm:%s4] %v177
    %s181 = smul.addr 2, 4
    %s182 = scalar_lea.vmem %s0, %s181
    %s183 = sshrl.u32 %s4, 1
    %s184 = sor.u32 %s4, %s183
    %s185 = sand.u32 %s184, 85
    %s186 = sshrl.u32 %s185, 1
    %s187 = sor.u32 %s185, %s186
    %s188 = sand.u32 51, %s187
    %s189 = sshrl.u32 %s188, 2
    %s190 = sor.u32 %s188, %s189
    %s191 = sand.u32 15, %s190
    %v192 = vld [vmem:[%s182] sm:%s191]
    %v193 = vunpack.c.l.bf16 %v192
    %v194 = vunpack.c.h.bf16 %v192
    %s195 = scalar_lea.vmem [#allocation1], 32
    %196 = vst [vmem:[%s195] sm:%s4] %v193
    %s197 = smul.addr 2, 3
    %s198 = scalar_lea.vmem %s0, %s197
    %s199 = sshrl.u32 %s4, 1
    %s200 = sor.u32 %s4, %s199
    %s201 = sand.u32 %s200, 85
    %s202 = sshrl.u32 %s201, 1
    %s203 = sor.u32 %s201, %s202
    %s204 = sand.u32 51, %s203
    %s205 = sshrl.u32 %s204, 2
    %s206 = sor.u32 %s204, %s205
    %s207 = sand.u32 15, %s206
    %v208 = vld [vmem:[%s198] sm:%s207]
    %v209 = vunpack.c.l.bf16 %v208
    %v210 = vunpack.c.h.bf16 %v208
    %s211 = scalar_lea.vmem [#allocation1], 24
    %212 = vst [vmem:[%s211] sm:%s4] %v209
    %s213 = smul.addr 2, 2
    %s214 = scalar_lea.vmem %s0, %s213
    %s215 = sshrl.u32 %s4, 1
    %s216 = sor.u32 %s4, %s215
    %s217 = sand.u32 %s216, 85
    %s218 = sshrl.u32 %s217, 1
    %s219 = sor.u32 %s217, %s218
    %s220 = sand.u32 51, %s219
    %s221 = sshrl.u32 %s220, 2
    %s222 = sor.u32 %s220, %s221
    %s223 = sand.u32 15, %s222
    %v224 = vld [vmem:[%s214] sm:%s223]
    %v225 = vunpack.c.l.bf16 %v224
    %v226 = vunpack.c.h.bf16 %v224
    %s227 = scalar_lea.vmem [#allocation1], 16
    %228 = vst [vmem:[%s227] sm:%s4] %v225
    %s229 = scalar_lea.vmem %s0, 2
    %s230 = sshrl.u32 %s4, 1
    %s231 = sor.u32 %s4, %s230
    %s232 = sand.u32 %s231, 85
    %s233 = sshrl.u32 %s232, 1
    %s234 = sor.u32 %s232, %s233
    %s235 = sand.u32 51, %s234
    %s236 = sshrl.u32 %s235, 2
    %s237 = sor.u32 %s235, %s236
    %s238 = sand.u32 15, %s237
    %v239 = vld [vmem:[%s229] sm:%s238]
    %v240 = vunpack.c.l.bf16 %v239
    %v241 = vunpack.c.h.bf16 %v239
    %s242 = scalar_lea.vmem [#allocation1], 8
    %243 = vst [vmem:[%s242] sm:%s4] %v240
    %s244 = sshrl.u32 %s4, 1
    %s245 = sor.u32 %s4, %s244
    %s246 = sand.u32 %s245, 85
    %s247 = sshrl.u32 %s246, 1
    %s248 = sor.u32 %s246, %s247
    %s249 = sand.u32 51, %s248
    %s250 = sshrl.u32 %s249, 2
    %s251 = sor.u32 %s249, %s250
    %s252 = sand.u32 15, %s251
    %v253 = vld [vmem:[%s0] sm:%s252]
    %v254 = vunpack.c.l.bf16 %v253
    %v255 = vunpack.c.h.bf16 %v253
    %256 = vst [vmem:[#allocation1] sm:%s4] %v254
    %v257 = vld [vmem:[#allocation1] ss:$8 sm:$0xf]
    %v258 = vld [vmem:[#allocation1] ss:$8 sm:$0xf0]
    %vm259 = vcmask 1047556
    %v260 = vsel %vm259, %v258, %v257
    %vm261 = vcmask 130048
    %262 = vst.msk [vmem:[#allocation0] sm:$0xff] %vm261, %v260
    %s263 = scalar_lea.vmem [#allocation1], 64
    %v264 = vld [vmem:[%s263] ss:$8 sm:$0xf]
    %s265 = scalar_lea.vmem [#allocation1], 64
    %v266 = vld [vmem:[%s265] ss:$8 sm:$0xf0]
    %vm267 = vcmask 1047556
    %v268 = vsel %vm267, %v266, %v264
    %vm269 = vcmask 130048
    %s270 = scalar_lea.vmem [#allocation0], 8
    %271 = vst.msk [vmem:[%s270] sm:$0xff] %vm269, %v268
    %s272 = scalar_lea.vmem [#allocation1], 3
    %v273 = vld [vmem:[%s272] ss:$8 sm:$0xf]
    %s274 = scalar_lea.vmem [#allocation1], 3
    %v275 = vld [vmem:[%s274] ss:$8 sm:$0xf0]
    %vm276 = vcmask 1047556
    %v277 = vsel %vm276, %v275, %v273
    %278 = vrot.lane.b32.xlu0 %v277, 48
    %v279 = vpop.permute.xlu0 %278
    %vm280 = vcmask 523648
    %281 = vst.msk [vmem:[#allocation0] sm:$0xff] %vm280, %v279
    %s282 = scalar_lea.vmem [#allocation1], 67
    %v283 = vld [vmem:[%s282] ss:$8 sm:$0xf]
    %s284 = scalar_lea.vmem [#allocation1], 67
    %v285 = vld [vmem:[%s284] ss:$8 sm:$0xf0]
    %vm286 = vcmask 1047556
    %v287 = vsel %vm286, %v285, %v283
    %288 = vrot.lane.b32.xlu0 %v287, 48
    %v289 = vpop.permute.xlu0 %288
    %vm290 = vcmask 523648
    %s291 = scalar_lea.vmem [#allocation0], 8
    %292 = vst.msk [vmem:[%s291] sm:$0xff] %vm290, %v289
    %s293 = scalar_lea.vmem [#allocation1], 2
    %v294 = vld [vmem:[%s293] ss:$8 sm:$0xf]
    %s295 = scalar_lea.vmem [#allocation1], 2
    %v296 = vld [vmem:[%s295] ss:$8 sm:$0xf0]
    %vm297 = vcmask 1047556
    %v298 = vsel %vm297, %v296, %v294
    %299 = vrot.lane.b32.xlu0 %v298, 32
    %v300 = vpop.permute.xlu0 %299
    %vm301 = vcmask 392448
    %302 = vst.msk [vmem:[#allocation0] sm:$0xff] %vm301, %v300
    %s303 = scalar_lea.vmem [#allocation1], 66
    %v304 = vld [vmem:[%s303] ss:$8 sm:$0xf]
    %s305 = scalar_lea.vmem [#allocation1], 66
    %v306 = vld [vmem:[%s305] ss:$8 sm:$0xf0]
    %vm307 = vcmask 1047556
    %v308 = vsel %vm307, %v306, %v304
    %309 = vrot.lane.b32.xlu0 %v308, 32
    %v310 = vpop.permute.xlu0 %309
    %vm311 = vcmask 392448
    %s312 = scalar_lea.vmem [#allocation0], 8
    %313 = vst.msk [vmem:[%s312] sm:$0xff] %vm311, %v310
    %s314 = scalar_lea.vmem [#allocation1], 1
    %v315 = vld [vmem:[%s314] ss:$8 sm:$0xf]
    %s316 = scalar_lea.vmem [#allocation1], 1
    %v317 = vld [vmem:[%s316] ss:$8 sm:$0xf0]
    %vm318 = vcmask 1047556
    %v319 = vsel %vm318, %v317, %v315
    %320 = vrot.lane.b32.xlu0 %v319, 16
    %v321 = vpop.permute.xlu0 %320
    %vm322 = vcmask 261248
    %323 = vst.msk [vmem:[#allocation0] sm:$0xff] %vm322, %v321
    %s324 = scalar_lea.vmem [#allocation1], 65
    %v325 = vld [vmem:[%s324] ss:$8 sm:$0xf]
    %s326 = scalar_lea.vmem [#allocation1], 65
    %v327 = vld [vmem:[%s326] ss:$8 sm:$0xf0]
    %vm328 = vcmask 1047556
    %v329 = vsel %vm328, %v327, %v325
    %330 = vrot.lane.b32.xlu0 %v329, 16
    %v331 = vpop.permute.xlu0 %330
    %vm332 = vcmask 261248
    %s333 = scalar_lea.vmem [#allocation0], 8
    %334 = vst.msk [vmem:[%s333] sm:$0xff] %vm332, %v331
    %s336 = smul.u32 4, 2
    %s337 = sshllo.u32 0, %s336
    %s338 = sshrl.u32 %s336, 1
    %v339 = vld [vmem:[#allocation0] sm:%s337]
    %v340 = vpack.c.bf16 0.0, %v339
    %s341 = sshllo.u32 0, %s338
    %342 = vst [vmem:[%s1] sm:%s341] %v340
    %s343 = scalar_lea.vmem [#allocation0], 8
    %v344 = vld [vmem:[%s343] sm:%s337]
    %v345 = vpack.c.bf16 0.0, %v344
    %s346 = sshllo.u32 0, %s338
    %s347 = scalar_lea.vmem %s1, 4
    %348 = vst [vmem:[%s347] sm:%s346] %v345

// kernel: multi_headed_attention.1
$region0: #{multi_headed_attention.1}
  #allocation0 [shape = 'u32[]', space=smem, size = 0x4, offset = 0x4, fixed_abs, tag = 'smem constant byte address 0x4 - core index']
  #allocation1 [shape = 'u32[144,128]{1,0:T(1,128)}', space=vmem, size = 0x12000, scoped, tag = 'internal scratch']
  %s0 = inlined_call_operand.vmem [shape: bf16[64,128], index: 0, kind: input, shape index: {}]
  %s1 = inlined_call_operand.vmem [shape: bf16[128,24], index: 1, kind: input, shape index: {}]
  %s2 = inlined_call_operand.vmem [shape: f32[64,24], index: 2, kind: input, shape index: {}]
  %s3 = inlined_call_operand.vmem [shape: f32[64,64], index: 3, kind: input, shape index: {}]
  %s4 = inlined_call_operand.vmem [shape: bf16[8,32], index: 4, kind: input, shape index: {}]
  %s5 = inlined_call_operand.vmem [shape: f32[64,32], index: 5, kind: input, shape index: {}]
  %s6 = inlined_call_operand.vmem [shape: bf16[16,64], index: 6, kind: input, shape index: {}]
  %s7 = inlined_call_operand.vmem [shape: bf16[32,32], index: 7, kind: input, shape index: {}]
  %s8 = inlined_call_operand.vmem [shape: f32[1,32], index: 8, kind: input, shape index: {}]
  %s9 = inlined_call_operand.hbm [shape: f32[16,32], index: 9, kind: output, shape index: {}]
  %s10 = sld [smem:[#allocation0]]
  $region46: #{multi_headed_attention.1} parent=0
    _
  %s12 = ssub.s32 1, %s10
  %s13 = scalar_select 0, %s12, %s10
  $region1: #{multi_headed_attention.1} parent=0
    #allocation2 [shape = 'u8[8192]{0}', space=vmem, size = 0x2000, scoped, tag = 'output window, operand 0, single buffered']
    #allocation3 [shape = 's32[1]{0}', space=sflag, size = 0x4, scoped, tag = 'scoped memory for multi_headed_attention.1']
    %14 = vsyncpa [#allocation3], 0
    // Predicated region
    $region2: #{multi_headed_attention.1} parent=1 // pred_check
      _
    $region3: #{multi_headed_attention.1} parent=1 // pred_check_branch
      %16 = sbr.rel (0) target = $region5
    $region4: #{multi_headed_attention.1} parent=1 // pred_region
      _
    $region5: #{multi_headed_attention.1} parent=1 // pred_fallthru
      _
    // Predicated region
    $region6: #{multi_headed_attention.1} parent=1 // pred_check
      _
    $region7: #{multi_headed_attention.1} parent=1 // pred_check_branch
      %18 = sbr.rel (0) target = $region9
    $region8: #{multi_headed_attention.1} parent=1 // pred_region
      _
    $region9: #{multi_headed_attention.1} parent=1 // pred_fallthru
      _
    // Predicated region
    $region10: #{multi_headed_attention.1} parent=1 // pred_check
      _
    $region11: #{multi_headed_attention.1} parent=1 // pred_check_branch
      %20 = sbr.rel (0) target = $region13
    $region12: #{multi_headed_attention.1} parent=1 // pred_region
      _
    $region13: #{multi_headed_attention.1} parent=1 // pred_fallthru
      _
    // Predicated region
    $region14: #{multi_headed_attention.1} parent=1 // pred_check
      _
    $region15: #{multi_headed_attention.1} parent=1 // pred_check_branch
      %22 = sbr.rel (0) target = $region17
    $region16: #{multi_headed_attention.1} parent=1 // pred_region
      _
    $region17: #{multi_headed_attention.1} parent=1 // pred_fallthru
      _
    // Predicated region
    $region18: #{multi_headed_attention.1} parent=1 // pred_check
      _
    $region19: #{multi_headed_attention.1} parent=1 // pred_check_branch
      %24 = sbr.rel (0) target = $region21
    $region20: #{multi_headed_attention.1} parent=1 // pred_region
      _
    $region21: #{multi_headed_attention.1} parent=1 // pred_fallthru
      _
    // Predicated region
    $region22: #{multi_headed_attention.1} parent=1 // pred_check
      _
    $region23: #{multi_headed_attention.1} parent=1 // pred_check_branch
      %26 = sbr.rel (0) target = $region25
    $region24: #{multi_headed_attention.1} parent=1 // pred_region
      _
    $region25: #{multi_headed_attention.1} parent=1 // pred_fallthru
      _
    // Predicated region
    $region26: #{multi_headed_attention.1} parent=1 // pred_check
      _
    $region27: #{multi_headed_attention.1} parent=1 // pred_check_branch
      %28 = sbr.rel (0) target = $region29
    $region28: #{multi_headed_attention.1} parent=1 // pred_region
      _
    $region29: #{multi_headed_attention.1} parent=1 // pred_fallthru
      _
    // Predicated region
    $region30: #{multi_headed_attention.1} parent=1 // pred_check
      _
    $region31: #{multi_headed_attention.1} parent=1 // pred_check_branch
      %30 = sbr.rel (0) target = $region33
    $region32: #{multi_headed_attention.1} parent=1 // pred_region
      _
    $region33: #{multi_headed_attention.1} parent=1 // pred_fallthru
      _
    // Predicated region
    $region34: #{multi_headed_attention.1} parent=1 // pred_check
      _
    $region35: #{multi_headed_attention.1} parent=1 // pred_check_branch
      %32 = sbr.rel (0) target = $region37
    $region36: #{multi_headed_attention.1} parent=1 // pred_region
      _
    $region37: #{multi_headed_attention.1} parent=1 // pred_fallthru
      _
    %v34 = vld [vmem:[%s0] sm:$0xf]
    %v35 = vld [vmem:[%s0 + $0x4] sm:$0xf]
    %v36 = vld [vmem:[%s0 + $0x8] sm:$0xf]
    %v37 = vld [vmem:[%s0 + $0xc] sm:$0xf]
    %v38 = vld [vmem:[%s0 + $0x10] sm:$0xf]
    %v39 = vld [vmem:[%s0 + $0x14] sm:$0xf]
    %v40 = vld [vmem:[%s0 + $0x18] sm:$0xf]
    %v41 = vld [vmem:[%s0 + $0x1c] sm:$0xf]
    %v42 = vld [vmem:[%s1] sm:$0xf]
    %v43 = vld [vmem:[%s1 + $0x4] sm:$0xf]
    %v44 = vld [vmem:[%s1 + $0x8] sm:$0xf]
    %v45 = vld [vmem:[%s1 + $0xc] sm:$0xf]
    %v46 = vld [vmem:[%s1 + $0x10] sm:$0xf]
    %v47 = vld [vmem:[%s1 + $0x14] sm:$0xf]
    %v48 = vld [vmem:[%s1 + $0x18] sm:$0xf]
    %v49 = vld [vmem:[%s1 + $0x1c] sm:$0xf]
    %v50 = vld [vmem:[%s1 + $0x20] sm:$0xf]
    %v51 = vld [vmem:[%s1 + $0x24] sm:$0xf]
    %v52 = vld [vmem:[%s1 + $0x28] sm:$0xf]
    %v53 = vld [vmem:[%s1 + $0x2c] sm:$0xf]
    %v54 = vld [vmem:[%s1 + $0x30] sm:$0xf]
    %v55 = vld [vmem:[%s1 + $0x34] sm:$0xf]
    %v56 = vld [vmem:[%s1 + $0x38] sm:$0xf]
    %v57 = vld [vmem:[%s1 + $0x3c] sm:$0xf]
    %v58 = vld [vmem:[%s2] sm:$0xff]
    %v59 = vld [vmem:[%s2 + $0x8] sm:$0xff]
    %v60 = vld [vmem:[%s2 + $0x10] sm:$0xff]
    %v61 = vld [vmem:[%s2 + $0x18] sm:$0xff]
    %v62 = vld [vmem:[%s2 + $0x20] sm:$0xff]
    %v63 = vld [vmem:[%s2 + $0x28] sm:$0xff]
    %v64 = vld [vmem:[%s2 + $0x30] sm:$0xff]
    %v65 = vld [vmem:[%s2 + $0x38] sm:$0xff]
    %v74 = vunpack.c.l.b16 %v34
    %v75 = vunpack.c.l.b16 %v35
    %v76 = vunpack.c.l.b16 %v36
    %v77 = vunpack.c.l.b16 %v37
    %v78 = vunpack.c.l.b16 %v38
    %v79 = vunpack.c.l.b16 %v39
    %v80 = vunpack.c.l.b16 %v40
    %v81 = vunpack.c.l.b16 %v41
    %v82 = vpack.c.b16 %v75, %v74
    %v83 = vpack.c.b16 %v77, %v76
    %v84 = vpack.c.b16 %v79, %v78
    %v85 = vpack.c.b16 %v81, %v80
    %v106 = vunpack.c.l.b16 %v42
    %v107 = vunpack.c.l.b16 %v43
    %v108 = vunpack.c.l.b16 %v44
    %v109 = vunpack.c.l.b16 %v45
    %v110 = vunpack.c.l.b16 %v46
    %v111 = vunpack.c.l.b16 %v47
    %v112 = vunpack.c.l.b16 %v48
    %v113 = vunpack.c.l.b16 %v49
    %v114 = vunpack.c.l.b16 %v50
    %v115 = vunpack.c.l.b16 %v51
    %v116 = vunpack.c.l.b16 %v52
    %v117 = vunpack.c.l.b16 %v53
    %v118 = vunpack.c.l.b16 %v54
    %v119 = vunpack.c.l.b16 %v55
    %v120 = vunpack.c.l.b16 %v56
    %v121 = vunpack.c.l.b16 %v57
    %v122 = vpack.c.b16 %v107, %v106
    %v123 = vpack.c.b16 %v109, %v108
    %v124 = vpack.c.b16 %v111, %v110
    %v125 = vpack.c.b16 %v113, %v112
    %v126 = vpack.c.b16 %v115, %v114
    %v127 = vpack.c.b16 %v117, %v116
    %v128 = vpack.c.b16 %v119, %v118
    %v129 = vpack.c.b16 %v121, %v120
    %138 = vmatprep.subr.bf16.mxu0 0
    %139 = vmatpush1.bf16.msra.mxu0 %v122
    %140 = vmatprep.subr.bf16.mxu0 0
    %141 = vmatpush1.bf16.msra.mxu0 %v123
    %142 = vmatprep.subr.bf16.mxu0 0
    %143 = vmatpush1.bf16.msra.mxu0 %v124
    %144 = vmatprep.subr.bf16.mxu0 0
    %145 = vmatpush1.bf16.msra.mxu0 %v125
    %146 = vmatprep.subr.bf16.mxu0 0
    %147 = vmatpush1.bf16.msra.mxu0 %v126
    %148 = vmatprep.subr.bf16.mxu0 0
    %149 = vmatpush1.bf16.msra.mxu0 %v127
    %150 = vmatprep.subr.bf16.mxu0 0
    %151 = vmatpush1.bf16.msra.mxu0 %v128
    %152 = vmatprep.subr.bf16.mxu0 0
    %153 = vmatpush1.bf16.msra.mxu0 %v129
    %154 = vmatprep.subr.bf16.mxu0 0
    %155 = vmatpush1.bf16.msra.mxu0 0
    %156 = vmatprep.subr.bf16.mxu0 0
    %157 = vmatpush1.bf16.msra.mxu0 0
    %158 = vmatprep.subr.bf16.mxu0 0
    %159 = vmatpush1.bf16.msra.mxu0 0
    %160 = vmatprep.subr.bf16.mxu0 0
    %161 = vmatpush1.bf16.msra.mxu0 0
    %162 = vmatprep.subr.bf16.mxu0 0
    %163 = vmatpush1.bf16.msra.mxu0 0
    %164 = vmatprep.subr.bf16.mxu0 0
    %165 = vmatpush1.bf16.msra.mxu0 0
    %166 = vmatprep.subr.bf16.mxu0 0
    %167 = vmatpush1.bf16.msra.mxu0 0
    %168 = vmatprep.subr.bf16.mxu0 0
    %169 = vmatpush1.bf16.msra.mxu0 0
    %170 = vmatprep.mubr.bf16.mxu0 0
    %171 = vmatmul.mubr.bf16.gmra.mrb[0].mxu0 %v82
    %v172 = vpop.f32.mrb[0].mxu0
    %v173 = vadd.f32 %v58, %v172
    %v174 = vpop.f32.mrb[0].mxu0
    %v175 = vpop.f32.mrb[0].mxu0
    %v176 = vadd.f32 %v59, %v175
    %v177 = vpop.f32.mrb[0].mxu0
    %178 = vmatprep.mubr.bf16.mxu0 0
    %179 = vmatmul.mubr.bf16.gmra.mrb[0].mxu0 %v83
    %v180 = vpop.f32.mrb[0].mxu0
    %v181 = vadd.f32 %v60, %v180
    %v182 = vpop.f32.mrb[0].mxu0
    %v183 = vpop.f32.mrb[0].mxu0
    %v184 = vadd.f32 %v61, %v183
    %v185 = vpop.f32.mrb[0].mxu0
    %186 = vmatprep.mubr.bf16.mxu0 0
    %187 = vmatmul.mubr.bf16.gmra.mrb[0].mxu0 %v84
    %v188 = vpop.f32.mrb[0].mxu0
    %v189 = vadd.f32 %v62, %v188
    %v190 = vpop.f32.mrb[0].mxu0
    %v191 = vpop.f32.mrb[0].mxu0
    %v192 = vadd.f32 %v63, %v191
    %v193 = vpop.f32.mrb[0].mxu0
    %194 = vmatprep.mubr.bf16.mxu0 0
    %195 = vmatmul.mubr.bf16.gmra.mrb[0].mxu0 %v85
    %v196 = vpop.f32.mrb[0].mxu0
    %v197 = vadd.f32 %v64, %v196
    %v198 = vpop.f32.mrb[0].mxu0
    %v199 = vpop.f32.mrb[0].mxu0
    %v200 = vadd.f32 %v65, %v199
    %v201 = vpop.f32.mrb[0].mxu0
    %202 = vdwg.mxu0
    %v203 = vpack.c.bf16 %v176, %v173
    %v204 = vpack.c.bf16 %v184, %v181
    %v205 = vpack.c.bf16 %v192, %v189
    %v206 = vpack.c.bf16 %v200, %v197
    %211 = vrot.lane.b32.xlu0 %v203, 120
    %v212 = vpop.permute.xlu0 %211
    %213 = vrot.lane.b32.xlu0 %v204, 120
    %v214 = vpop.permute.xlu0 %213
    %215 = vrot.lane.b32.xlu0 %v205, 120
    %v216 = vpop.permute.xlu0 %215
    %217 = vrot.lane.b32.xlu0 %v206, 120
    %v218 = vpop.permute.xlu0 %217
    %vm219 = vcmask 64512
    %v221 = vsel %vm219, %v203, 0
    %v224 = vsel %vm219, %v204, 0
    %v227 = vsel %vm219, %v205, 0
    %v230 = vsel %vm219, %v206, 0
    %v233 = vsel %vm219, %v212, 0
    %v236 = vsel %vm219, %v214, 0
    %v239 = vsel %vm219, %v216, 0
    %v242 = vsel %vm219, %v218, 0
    %244 = vmatprep.subr.bf16.mxu0 0
    %245 = vmatpush1.bf16.xpose.msra.mxu0 %v233
    %246 = vmatprep.subr.bf16.mxu0 0
    %247 = vmatpush1.bf16.xpose.msra.mxu0 %v236
    %248 = vmatprep.subr.bf16.mxu0 0
    %249 = vmatpush1.bf16.xpose.msra.mxu0 %v239
    %250 = vmatprep.subr.bf16.mxu0 0
    %251 = vmatpush1.bf16.xpose.msra.mxu0 %v242
    %252 = vmatprep.subr.bf16.mxu0 0
    %253 = vmatpush1.bf16.xpose.msra.mxu0 0
    %254 = vmatprep.subr.bf16.mxu0 0
    %255 = vmatpush1.bf16.xpose.msra.mxu0 0
    %256 = vmatprep.subr.bf16.mxu0 0
    %257 = vmatpush1.bf16.xpose.msra.mxu0 0
    %258 = vmatprep.subr.bf16.mxu0 0
    %259 = vmatpush1.bf16.xpose.msra.mxu0 0
    %260 = vmatprep.subr.bf16.mxu0 0
    %261 = vmatpush1.bf16.xpose.msra.mxu0 0
    %262 = vmatprep.subr.bf16.mxu0 0
    %263 = vmatpush1.bf16.xpose.msra.mxu0 0
    %264 = vmatprep.subr.bf16.mxu0 0
    %265 = vmatpush1.bf16.xpose.msra.mxu0 0
    %266 = vmatprep.subr.bf16.mxu0 0
    %267 = vmatpush1.bf16.xpose.msra.mxu0 0
    %268 = vmatprep.subr.bf16.mxu0 0
    %269 = vmatpush1.bf16.xpose.msra.mxu0 0
    %270 = vmatprep.subr.bf16.mxu0 0
    %271 = vmatpush1.bf16.xpose.msra.mxu0 0
    %272 = vmatprep.subr.bf16.mxu0 0
    %273 = vmatpush1.bf16.xpose.msra.mxu0 0
    %274 = vmatprep.subr.bf16.mxu0 0
    %275 = vmatpush1.bf16.xpose.msra.mxu0 0
    %276 = vmatprep.mubr.bf16.mxu0 0
    %277 = vmatmul.mubr.bf16.gmra.mrb[0].mxu0 %v221
    %v278 = vpop.f32.mrb[0].mxu0
    %v279 = vadd.f32 0.0, %v278
    %v280 = vpop.f32.mrb[0].mxu0
    %v281 = vpop.f32.mrb[0].mxu0
    %v282 = vadd.f32 0.0, %v281
    %v283 = vpop.f32.mrb[0].mxu0
    %284 = vmatprep.mubr.bf16.mxu0 0
    %285 = vmatmul.mubr.bf16.gmra.mrb[0].mxu0 %v224
    %v286 = vpop.f32.mrb[0].mxu0
    %v287 = vadd.f32 0.0, %v286
    %v288 = vpop.f32.mrb[0].mxu0
    %v289 = vpop.f32.mrb[0].mxu0
    %v290 = vadd.f32 0.0, %v289
    %v291 = vpop.f32.mrb[0].mxu0
    %292 = vmatprep.mubr.bf16.mxu0 0
    %293 = vmatmul.mubr.bf16.gmra.mrb[0].mxu0 %v227
    %v294 = vpop.f32.mrb[0].mxu0
    %v295 = vadd.f32 0.0, %v294
    %v296 = vpop.f32.mrb[0].mxu0
    %v297 = vpop.f32.mrb[0].mxu0
    %v298 = vadd.f32 0.0, %v297
    %v299 = vpop.f32.mrb[0].mxu0
    %300 = vmatprep.mubr.bf16.mxu0 0
    %301 = vmatmul.mubr.bf16.gmra.mrb[0].mxu0 %v230
    %v302 = vpop.f32.mrb[0].mxu0
    %v303 = vadd.f32 0.0, %v302
    %v304 = vpop.f32.mrb[0].mxu0
    %v305 = vpop.f32.mrb[0].mxu0
    %v306 = vadd.f32 0.0, %v305
    %v307 = vpop.f32.mrb[0].mxu0
    %308 = vdwg.mxu0
    %v309 = vmul.f32 %v279, 0.35355338
    %v310 = vmul.f32 %v282, 0.35355338
    %v311 = vmul.f32 %v287, 0.35355338
    %v312 = vmul.f32 %v290, 0.35355338
    %v313 = vmul.f32 %v295, 0.35355338
    %v314 = vmul.f32 %v298, 0.35355338
    %v315 = vmul.f32 %v303, 0.35355338
    %v316 = vmul.f32 %v306, 0.35355338
    %v317 = vld [vmem:[%s3] sm:$0xff]
    %v318 = vld [vmem:[%s3 + $0x8] sm:$0xff]
    %v319 = vld [vmem:[%s3 + $0x10] sm:$0xff]
    %v320 = vld [vmem:[%s3 + $0x18] sm:$0xff]
    %v321 = vld [vmem:[%s3 + $0x20] sm:$0xff]
    %v322 = vld [vmem:[%s3 + $0x28] sm:$0xff]
    %v323 = vld [vmem:[%s3 + $0x30] sm:$0xff]
    %v324 = vld [vmem:[%s3 + $0x38] sm:$0xff]
    %v325 = vadd.f32 %v309, %v317
    %v326 = vadd.f32 %v310, %v318
    %v327 = vadd.f32 %v311, %v319
    %v328 = vadd.f32 %v312, %v320
    %v329 = vadd.f32 %v313, %v321
    %v330 = vadd.f32 %v314, %v322
    %v331 = vadd.f32 %v315, %v323
    %v332 = vadd.f32 %v316, %v324
    %vm333 = vcmask 523264
    %v334 = vsel %vm333, %v325, -inf
    %335 = vmax.xlane.f32.xlu0 %v334
    %v336 = vpop.xlane.xlu0 %335
    %v337 = vsel %vm333, %v326, -inf
    %338 = vmax.xlane.f32.xlu0 %v337
    %v339 = vpop.xlane.xlu0 %338
    %v340 = vsel %vm333, %v327, -inf
    %341 = vmax.xlane.f32.xlu0 %v340
    %v342 = vpop.xlane.xlu0 %341
    %v343 = vsel %vm333, %v328, -inf
    %344 = vmax.xlane.f32.xlu0 %v343
    %v345 = vpop.xlane.xlu0 %344
    %v346 = vsel %vm333, %v329, -inf
    %347 = vmax.xlane.f32.xlu0 %v346
    %v348 = vpop.xlane.xlu0 %347
    %v349 = vsel %vm333, %v330, -inf
    %350 = vmax.xlane.f32.xlu0 %v349
    %v351 = vpop.xlane.xlu0 %350
    %v352 = vsel %vm333, %v331, -inf
    %353 = vmax.xlane.f32.xlu0 %v352
    %v354 = vpop.xlane.xlu0 %353
    %v355 = vsel %vm333, %v332, -inf
    %356 = vmax.xlane.f32.xlu0 %v355
    %v357 = vpop.xlane.xlu0 %356
    %v358 = vsub.f32 %v325, %v336
    %v359 = vsub.f32 %v326, %v339
    %v360 = vsub.f32 %v327, %v342
    %v361 = vsub.f32 %v328, %v345
    %v362 = vsub.f32 %v329, %v348
    %v363 = vsub.f32 %v330, %v351
    %v364 = vsub.f32 %v331, %v354
    %v365 = vsub.f32 %v332, %v357
    %v366 = vmul.f32 %v358, 1.442695
    %v367 = vpow.pop %v366
    %v368 = vmul.f32 %v359, 1.442695
    %v369 = vpow.pop %v368
    %v370 = vmul.f32 %v360, 1.442695
    %v371 = vpow.pop %v370
    %v372 = vmul.f32 %v361, 1.442695
    %v373 = vpow.pop %v372
    %v374 = vmul.f32 %v362, 1.442695
    %v375 = vpow.pop %v374
    %v376 = vmul.f32 %v363, 1.442695
    %v377 = vpow.pop %v376
    %v378 = vmul.f32 %v364, 1.442695
    %v379 = vpow.pop %v378
    %v380 = vmul.f32 %v365, 1.442695
    %v381 = vpow.pop %v380
    %v382 = vsel %vm333, %v367, 0.0
    %383 = vadd.xlane.f32.xlu0 %v382
    %v384 = vpop.xlane.xlu0 %383
    %v385 = vsel %vm333, %v369, 0.0
    %386 = vadd.xlane.f32.xlu0 %v385
    %v387 = vpop.xlane.xlu0 %386
    %v388 = vsel %vm333, %v371, 0.0
    %389 = vadd.xlane.f32.xlu0 %v388
    %v390 = vpop.xlane.xlu0 %389
    %v391 = vsel %vm333, %v373, 0.0
    %392 = vadd.xlane.f32.xlu0 %v391
    %v393 = vpop.xlane.xlu0 %392
    %v394 = vsel %vm333, %v375, 0.0
    %395 = vadd.xlane.f32.xlu0 %v394
    %v396 = vpop.xlane.xlu0 %395
    %v397 = vsel %vm333, %v377, 0.0
    %398 = vadd.xlane.f32.xlu0 %v397
    %v399 = vpop.xlane.xlu0 %398
    %v400 = vsel %vm333, %v379, 0.0
    %401 = vadd.xlane.f32.xlu0 %v400
    %v402 = vpop.xlane.xlu0 %401
    %v403 = vsel %vm333, %v381, 0.0
    %404 = vadd.xlane.f32.xlu0 %v403
    %v405 = vpop.xlane.xlu0 %404
    %v406 = vrcp.pop %v384
    %v407 = vmul.f32 %v367, %v406
    %v408 = vrcp.pop %v387
    %v409 = vmul.f32 %v369, %v408
    %v410 = vrcp.pop %v390
    %v411 = vmul.f32 %v371, %v410
    %v412 = vrcp.pop %v393
    %v413 = vmul.f32 %v373, %v412
    %v414 = vrcp.pop %v396
    %v415 = vmul.f32 %v375, %v414
    %v416 = vrcp.pop %v399
    %v417 = vmul.f32 %v377, %v416
    %v418 = vrcp.pop %v402
    %v419 = vmul.f32 %v379, %v418
    %v420 = vrcp.pop %v405
    %v421 = vmul.f32 %v381, %v420
    %v422 = vpack.c.bf16 %v409, %v407
    %v423 = vpack.c.bf16 %v413, %v411
    %v424 = vpack.c.bf16 %v417, %v415
    %v425 = vpack.c.bf16 %v421, %v419
    %426 = vrot.lane.b32.xlu0 %v203, 112
    %v427 = vpop.permute.xlu0 %426
    %428 = vrot.lane.b32.xlu0 %v204, 112
    %v429 = vpop.permute.xlu0 %428
    %430 = vrot.lane.b32.xlu0 %v205, 112
    %v431 = vpop.permute.xlu0 %430
    %432 = vrot.lane.b32.xlu0 %v206, 112
    %v433 = vpop.permute.xlu0 %432
    %v439 = vsel %vm333, %v422, 0
    %v442 = vsel %vm333, %v423, 0
    %v445 = vsel %vm333, %v424, 0
    %v448 = vsel %vm333, %v425, 0
    %450 = vmatprep.subr.bf16.mxu0 0
    %451 = vmatpush1.bf16.msra.mxu0 %v427
    %452 = vmatprep.subr.bf16.mxu0 0
    %453 = vmatpush1.bf16.msra.mxu0 %v429
    %454 = vmatprep.subr.bf16.mxu0 0
    %455 = vmatpush1.bf16.msra.mxu0 %v431
    %456 = vmatprep.subr.bf16.mxu0 0
    %457 = vmatpush1.bf16.msra.mxu0 %v433
    %458 = vmatprep.subr.bf16.mxu0 0
    %459 = vmatpush1.bf16.msra.mxu0 0
    %460 = vmatprep.subr.bf16.mxu0 0
    %461 = vmatpush1.bf16.msra.mxu0 0
    %462 = vmatprep.subr.bf16.mxu0 0
    %463 = vmatpush1.bf16.msra.mxu0 0
    %464 = vmatprep.subr.bf16.mxu0 0
    %465 = vmatpush1.bf16.msra.mxu0 0
    %466 = vmatprep.subr.bf16.mxu0 0
    %467 = vmatpush1.bf16.msra.mxu0 0
    %468 = vmatprep.subr.bf16.mxu0 0
    %469 = vmatpush1.bf16.msra.mxu0 0
    %470 = vmatprep.subr.bf16.mxu0 0
    %471 = vmatpush1.bf16.msra.mxu0 0
    %472 = vmatprep.subr.bf16.mxu0 0
    %473 = vmatpush1.bf16.msra.mxu0 0
    %474 = vmatprep.subr.bf16.mxu0 0
    %475 = vmatpush1.bf16.msra.mxu0 0
    %476 = vmatprep.subr.bf16.mxu0 0
    %477 = vmatpush1.bf16.msra.mxu0 0
    %478 = vmatprep.subr.bf16.mxu0 0
    %479 = vmatpush1.bf16.msra.mxu0 0
    %480 = vmatprep.subr.bf16.mxu0 0
    %481 = vmatpush1.bf16.msra.mxu0 0
    %482 = vmatprep.mubr.bf16.mxu0 0
    %483 = vmatmul.mubr.bf16.gmra.mrb[0].mxu0 %v439
    %v484 = vpop.f32.mrb[0].mxu0
    %v485 = vadd.f32 0.0, %v484
    %v486 = vpop.f32.mrb[0].mxu0
    %v487 = vpop.f32.mrb[0].mxu0
    %v488 = vadd.f32 0.0, %v487
    %v489 = vpop.f32.mrb[0].mxu0
    %490 = vmatprep.mubr.bf16.mxu0 0
    %491 = vmatmul.mubr.bf16.gmra.mrb[0].mxu0 %v442
    %v492 = vpop.f32.mrb[0].mxu0
    %v493 = vadd.f32 0.0, %v492
    %v494 = vpop.f32.mrb[0].mxu0
    %v495 = vpop.f32.mrb[0].mxu0
    %v496 = vadd.f32 0.0, %v495
    %v497 = vpop.f32.mrb[0].mxu0
    %498 = vmatprep.mubr.bf16.mxu0 0
    %499 = vmatmul.mubr.bf16.gmra.mrb[0].mxu0 %v445
    %v500 = vpop.f32.mrb[0].mxu0
    %v501 = vadd.f32 0.0, %v500
    %v502 = vpop.f32.mrb[0].mxu0
    %v503 = vpop.f32.mrb[0].mxu0
    %v504 = vadd.f32 0.0, %v503
    %v505 = vpop.f32.mrb[0].mxu0
    %506 = vmatprep.mubr.bf16.mxu0 0
    %507 = vmatmul.mubr.bf16.gmra.mrb[0].mxu0 %v448
    %v508 = vpop.f32.mrb[0].mxu0
    %v509 = vadd.f32 0.0, %v508
    %v510 = vpop.f32.mrb[0].mxu0
    %v511 = vpop.f32.mrb[0].mxu0
    %v512 = vadd.f32 0.0, %v511
    %v513 = vpop.f32.mrb[0].mxu0
    %514 = vdwg.mxu0
    %v515 = vpack.c.bf16 %v488, %v485
    %v516 = vpack.c.bf16 %v496, %v493
    %v517 = vpack.c.bf16 %v504, %v501
    %v518 = vpack.c.bf16 %v512, %v509
    %v519 = vld [vmem:[%s4] sm:$0xf]
    %v521 = vsel %vm219, %v515, 0
    %v524 = vsel %vm219, %v516, 0
    %v527 = vsel %vm219, %v517, 0
    %v530 = vsel %vm219, %v518, 0
    %vm532 = vcmask 1043456
    %v534 = vsel %vm532, %v519, 0
    %536 = vmatprep.subr.bf16.mxu0 0
    %537 = vmatpush1.bf16.msra.mxu0 %v534
    %538 = vmatprep.subr.bf16.mxu0 0
    %539 = vmatpush1.bf16.msra.mxu0 0
    %540 = vmatprep.subr.bf16.mxu0 0
    %541 = vmatpush1.bf16.msra.mxu0 0
    %542 = vmatprep.subr.bf16.mxu0 0
    %543 = vmatpush1.bf16.msra.mxu0 0
    %544 = vmatprep.subr.bf16.mxu0 0
    %545 = vmatpush1.bf16.msra.mxu0 0
    %546 = vmatprep.subr.bf16.mxu0 0
    %547 = vmatpush1.bf16.msra.mxu0 0
    %548 = vmatprep.subr.bf16.mxu0 0
    %549 = vmatpush1.bf16.msra.mxu0 0
    %550 = vmatprep.subr.bf16.mxu0 0
    %551 = vmatpush1.bf16.msra.mxu0 0
    %552 = vmatprep.subr.bf16.mxu0 0
    %553 = vmatpush1.bf16.msra.mxu0 0
    %554 = vmatprep.subr.bf16.mxu0 0
    %555 = vmatpush1.bf16.msra.mxu0 0
    %556 = vmatprep.subr.bf16.mxu0 0
    %557 = vmatpush1.bf16.msra.mxu0 0
    %558 = vmatprep.subr.bf16.mxu0 0
    %559 = vmatpush1.bf16.msra.mxu0 0
    %560 = vmatprep.subr.bf16.mxu0 0
    %561 = vmatpush1.bf16.msra.mxu0 0
    %562 = vmatprep.subr.bf16.mxu0 0
    %563 = vmatpush1.bf16.msra.mxu0 0
    %564 = vmatprep.subr.bf16.mxu0 0
    %565 = vmatpush1.bf16.msra.mxu0 0
    %566 = vmatprep.subr.bf16.mxu0 0
    %567 = vmatpush1.bf16.msra.mxu0 0
    %568 = vmatprep.mubr.bf16.mxu0 0
    %569 = vmatmul.mubr.bf16.gmra.mrb[0].mxu0 %v521
    %v570 = vpop.f32.mrb[0].mxu0
    %v571 = vadd.f32 0.0, %v570
    %v572 = vpop.f32.mrb[0].mxu0
    %v573 = vpop.f32.mrb[0].mxu0
    %v574 = vadd.f32 0.0, %v573
    %v575 = vpop.f32.mrb[0].mxu0
    %576 = vmatprep.mubr.bf16.mxu0 0
    %577 = vmatmul.mubr.bf16.gmra.mrb[0].mxu0 %v524
    %v578 = vpop.f32.mrb[0].mxu0
    %v579 = vadd.f32 0.0, %v578
    %v580 = vpop.f32.mrb[0].mxu0
    %v581 = vpop.f32.mrb[0].mxu0
    %v582 = vadd.f32 0.0, %v581
    %v583 = vpop.f32.mrb[0].mxu0
    %584 = vmatprep.mubr.bf16.mxu0 0
    %585 = vmatmul.mubr.bf16.gmra.mrb[0].mxu0 %v527
    %v586 = vpop.f32.mrb[0].mxu0
    %v587 = vadd.f32 0.0, %v586
    %v588 = vpop.f32.mrb[0].mxu0
    %v589 = vpop.f32.mrb[0].mxu0
    %v590 = vadd.f32 0.0, %v589
    %v591 = vpop.f32.mrb[0].mxu0
    %592 = vmatprep.mubr.bf16.mxu0 0
    %593 = vmatmul.mubr.bf16.gmra.mrb[0].mxu0 %v530
    %v594 = vpop.f32.mrb[0].mxu0
    %v595 = vadd.f32 0.0, %v594
    %v596 = vpop.f32.mrb[0].mxu0
    %v597 = vpop.f32.mrb[0].mxu0
    %v598 = vadd.f32 0.0, %v597
    %v599 = vpop.f32.mrb[0].mxu0
    %600 = vdwg.mxu0
    %v601 = vld [vmem:[%s5] sm:$0xff]
    %v602 = vld [vmem:[%s5 + $0x8] sm:$0xff]
    %v603 = vld [vmem:[%s5 + $0x10] sm:$0xff]
    %v604 = vld [vmem:[%s5 + $0x18] sm:$0xff]
    %v605 = vld [vmem:[%s5 + $0x20] sm:$0xff]
    %v606 = vld [vmem:[%s5 + $0x28] sm:$0xff]
    %v607 = vld [vmem:[%s5 + $0x30] sm:$0xff]
    %v608 = vld [vmem:[%s5 + $0x38] sm:$0xff]
    %v609 = vmul.f32 %v571, %v601
    %v610 = vmul.f32 %v574, %v602
    %v611 = vmul.f32 %v579, %v603
    %v612 = vmul.f32 %v582, %v604
    %v613 = vmul.f32 %v587, %v605
    %v614 = vmul.f32 %v590, %v606
    %v615 = vmul.f32 %v595, %v607
    %v616 = vmul.f32 %v598, %v608
    %v617 = vld [vmem:[%s6] sm:$0xf]
    %v618 = vld [vmem:[%s6 + $0x4] sm:$0xf]
    %v619 = vpack.c.bf16 %v610, %v609
    %v620 = vpack.c.bf16 %v612, %v611
    %v621 = vpack.c.bf16 %v614, %v613
    %v622 = vpack.c.bf16 %v616, %v615
    %v625 = vunpack.c.l.b16 %v617
    %v626 = vunpack.c.l.b16 %v618
    %v627 = vpack.c.b16 %v626, %v625
    %v629 = vsel %vm333, %v627, 0
    %631 = vmatprep.subr.bf16.mxu0 0
    %632 = vmatpush1.bf16.msra.mxu0 %v619
    %633 = vmatprep.subr.bf16.mxu0 0
    %634 = vmatpush1.bf16.msra.mxu0 %v620
    %635 = vmatprep.subr.bf16.mxu0 0
    %636 = vmatpush1.bf16.msra.mxu0 %v621
    %637 = vmatprep.subr.bf16.mxu0 0
    %638 = vmatpush1.bf16.msra.mxu0 %v622
    %639 = vmatprep.subr.bf16.mxu0 0
    %640 = vmatpush1.bf16.msra.mxu0 0
    %641 = vmatprep.subr.bf16.mxu0 0
    %642 = vmatpush1.bf16.msra.mxu0 0
    %643 = vmatprep.subr.bf16.mxu0 0
    %644 = vmatpush1.bf16.msra.mxu0 0
    %645 = vmatprep.subr.bf16.mxu0 0
    %646 = vmatpush1.bf16.msra.mxu0 0
    %647 = vmatprep.subr.bf16.mxu0 0
    %648 = vmatpush1.bf16.msra.mxu0 0
    %649 = vmatprep.subr.bf16.mxu0 0
    %650 = vmatpush1.bf16.msra.mxu0 0
    %651 = vmatprep.subr.bf16.mxu0 0
    %652 = vmatpush1.bf16.msra.mxu0 0
    %653 = vmatprep.subr.bf16.mxu0 0
    %654 = vmatpush1.bf16.msra.mxu0 0
    %655 = vmatprep.subr.bf16.mxu0 0
    %656 = vmatpush1.bf16.msra.mxu0 0
    %657 = vmatprep.subr.bf16.mxu0 0
    %658 = vmatpush1.bf16.msra.mxu0 0
    %659 = vmatprep.subr.bf16.mxu0 0
    %660 = vmatpush1.bf16.msra.mxu0 0
    %661 = vmatprep.subr.bf16.mxu0 0
    %662 = vmatpush1.bf16.msra.mxu0 0
    %663 = vmatprep.mubr.bf16.mxu0 0
    %664 = vmatmul.mubr.bf16.gmra.mrb[0].mxu0 %v629
    %v665 = vpop.f32.mrb[0].mxu0
    %v666 = vadd.f32 0.0, %v665
    %v667 = vpop.f32.mrb[0].mxu0
    %v668 = vpop.f32.mrb[0].mxu0
    %v669 = vadd.f32 0.0, %v668
    %v670 = vpop.f32.mrb[0].mxu0
    %671 = vdwg.mxu0
    %v672 = vpack.c.bf16 %v669, %v666
    %v673 = vld [vmem:[%s7] sm:$0xf]
    %v674 = vld [vmem:[%s7 + $0x4] sm:$0xf]
    %v675 = vld [vmem:[%s7 + $0x8] sm:$0xf]
    %v676 = vld [vmem:[%s7 + $0xc] sm:$0xf]
    %v677 = vld [vmem:[%s8] sm:$0x1]
    %v679 = vlaneseq
    %v680 = vshrl.u32 %v679, 7
    %v681 = vsub.s32 0, %v680
    %v682 = vrot.slane %v677, %v681
    %v688 = vunpack.c.l.b16 %v673
    %v689 = vunpack.c.l.b16 %v674
    %v690 = vunpack.c.l.b16 %v675
    %v691 = vunpack.c.l.b16 %v676
    %v692 = vpack.c.b16 %v689, %v688
    %v693 = vpack.c.b16 %v691, %v690
    %vm696 = vcmask 261120
    %v698 = vsel %vm696, %v672, 0
    %700 = vmatprep.subr.bf16.mxu0 0
    %701 = vmatpush1.bf16.msra.mxu0 %v692
    %702 = vmatprep.subr.bf16.mxu0 0
    %703 = vmatpush1.bf16.msra.mxu0 %v693
    %704 = vmatprep.subr.bf16.mxu0 0
    %705 = vmatpush1.bf16.msra.mxu0 0
    %706 = vmatprep.subr.bf16.mxu0 0
    %707 = vmatpush1.bf16.msra.mxu0 0
    %708 = vmatprep.subr.bf16.mxu0 0
    %709 = vmatpush1.bf16.msra.mxu0 0
    %710 = vmatprep.subr.bf16.mxu0 0
    %711 = vmatpush1.bf16.msra.mxu0 0
    %712 = vmatprep.subr.bf16.mxu0 0
    %713 = vmatpush1.bf16.msra.mxu0 0
    %714 = vmatprep.subr.bf16.mxu0 0
    %715 = vmatpush1.bf16.msra.mxu0 0
    %716 = vmatprep.subr.bf16.mxu0 0
    %717 = vmatpush1.bf16.msra.mxu0 0
    %718 = vmatprep.subr.bf16.mxu0 0
    %719 = vmatpush1.bf16.msra.mxu0 0
    %720 = vmatprep.subr.bf16.mxu0 0
    %721 = vmatpush1.bf16.msra.mxu0 0
    %722 = vmatprep.subr.bf16.mxu0 0
    %723 = vmatpush1.bf16.msra.mxu0 0
    %724 = vmatprep.subr.bf16.mxu0 0
    %725 = vmatpush1.bf16.msra.mxu0 0
    %726 = vmatprep.subr.bf16.mxu0 0
    %727 = vmatpush1.bf16.msra.mxu0 0
    %728 = vmatprep.subr.bf16.mxu0 0
    %729 = vmatpush1.bf16.msra.mxu0 0
    %730 = vmatprep.subr.bf16.mxu0 0
    %731 = vmatpush1.bf16.msra.mxu0 0
    %732 = vmatprep.mubr.bf16.mxu0 0
    %733 = vmatmul.mubr.bf16.gmra.mrb[0].mxu0 %v698
    %v734 = vpop.f32.mrb[0].mxu0
    %v735 = vadd.f32 %v682, %v734
    %v736 = vpop.f32.mrb[0].mxu0
    %v737 = vpop.f32.mrb[0].mxu0
    %v738 = vadd.f32 %v682, %v737
    %v739 = vpop.f32.mrb[0].mxu0
    %740 = vdwg.mxu0
    %741 = vst.msk [vmem:[#allocation2] sm:$0xff] %vm696, %v735
    %742 = vst.msk [vmem:[#allocation2 + $0x8] sm:$0xff] %vm696, %v738
    // Predicated region
    $region38: #{multi_headed_attention.1} parent=1 // pred_check
      _
    $region39: #{multi_headed_attention.1} parent=1 // pred_check_branch
      %744 = sbr.rel (0) target = $region41
    $region40: #{multi_headed_attention.1} parent=1 // pred_region
      %s746 = ssub.s32 256, 256
      %747 = vsyncadd [#allocation3], %s746
      %s748 = sshll.u32 [#allocation2], 4
      %s749 = int_to_ptr.vmem [resolvable:$true] %s748
      %754 = dma.vmem_to_hbm [thread:$0]  %s749, 256, %s9, [#allocation3], 128, 128, 8
    $region41: #{multi_headed_attention.1} parent=1 // pred_fallthru
      _
    // Predicated region
    $region42: #{multi_headed_attention.1} parent=1 // pred_check
      _
    $region43: #{multi_headed_attention.1} parent=1 // pred_check_branch
      %756 = sbr.rel (0) target = $region45
    $region44: #{multi_headed_attention.1} parent=1 // pred_region
      %757 = dma.done [#allocation3], 256
    $region45: #{multi_headed_attention.1} parent=1 // pred_fallthru
      _
    %758 = vsyncpa [#allocation3], 1

</llo_original>
